<compile_context>
chip_gen: v5e
topology: v5e:2x2
jax: 0.10.0
libtpu: 0.0.40
codegen_flags: <defaults>
</compile_context>

<pallas_src>
import functools

import jax
import jax.numpy as jnp
from jax import lax
from jax.experimental import pallas as pl
from jax.experimental.pallas import tpu as pltpu


# -----------------------------------------------------------------------------
# Kernel 1: conv2d (stride 1, 'same' padding) for NB images as a single im2col
#           matmul + per-step per-channel (mean, centered-M2) statistics.
# -----------------------------------------------------------------------------
def _conv_stats_kernel(x_ref, w_ref, y_ref, stats_ref, xpad_ref, patches_ref, *,
                       H, W, KH, KW, pad, Cin, Cin_pad, NB):
    # x_ref       : (NB, Cin, H*W)        NB images, spatial flattened (lanes = H*W)
    # w_ref       : (Cout, KH*KW*Cin_pad) conv weight, tap-major / channel-minor
    # y_ref       : (NB, Cout, H*W)       conv output (NCHW once reshaped)
    # stats_ref   : (1, Cout, 2)          [:, :, 0]=mean, [:, :, 1]=sum((y-mean)^2)
    # xpad_ref    : (NB, Cin_pad, L)      VMEM scratch: zero-halo'd flattened input
    # patches_ref : (K_pad, NB*H*W)       VMEM scratch: im2col matrix
    HW = H * W
    L = xpad_ref.shape[-1]
    off = pad * (W + 1)
    tail = L - off - HW

    # Zero ONLY the halo lanes + the zero-pad channel rows each step (the real-
    # channel center is fully overwritten below).  Must run every step: with
    # dimension_semantics=("parallel",) the grid is sharded across TensorCores on
    # v7x and each core owns its own scratch buffers.
    if off > 0:
        xpad_ref[:, :, :off] = jnp.zeros((NB, Cin_pad, off), xpad_ref.dtype)
    if tail > 0:
        xpad_ref[:, :, off + HW:] = jnp.zeros((NB, Cin_pad, tail), xpad_ref.dtype)
    if Cin_pad > Cin:
        xpad_ref[:, Cin:, off:off + HW] = jnp.zeros(
            (NB, Cin_pad - Cin, HW), xpad_ref.dtype)

    # Stage the NB input images:  xpad[b, c, off + i*W + j] = x[b, c, i, j]
    xpad_ref[:, :Cin, off:off + HW] = x_ref[...].astype(xpad_ref.dtype)

    # Horizontal wrap-around masks, hoisted out of the tap loops (one per distinct
    # nonzero dx = kw - pad; reused for every kh and every image).
    masks = {}
    need = sorted({kw - pad for kw in range(KW)} - {0})
    if need:
        col = lax.broadcasted_iota(jnp.int32, (1, HW), 1) % W
        for dx in need:
            masks[dx] = (col + dx >= 0) & (col + dx < W)

    # Build the im2col matrix (K_pad, NB*HW): tap-major / channel-minor rows,
    # images folded onto the lane axis.  Cin_pad keeps every staging store a full
    # sublane-aligned vst (no read-modify-write partial stores).
    for b in range(NB):
        base = b * HW
        tap = 0
        for kh in range(KH):                       # static: fully unrolled taps
            for kw in range(KW):
                start = kh * W + kw
                piece = xpad_ref[b, :, start:start + HW]          # (Cin_pad, HW)
                dx = kw - pad
                if dx != 0:                        # mask columns wrapping across rows
                    piece = jnp.where(masks[dx], piece, 0.0)
                patches_ref[tap * Cin_pad:(tap + 1) * Cin_pad,
                            base:base + HW] = piece
                tap += 1

    # ONE MXU contraction per grid step: (Cout, K_pad) @ (K_pad, NB*HW), f32 acc.
    acc = jnp.dot(w_ref[...], patches_ref[...],
                  preferred_element_type=jnp.float32)             # (Cout, NB*HW)

    for b in range(NB):                                           # lane-aligned slices
        y_ref[b] = acc[:, b * HW:(b + 1) * HW].astype(y_ref.dtype)

    # Per-step BN partial statistics over the NB*HW samples of this block
    # (lane-axis reductions -> XLU, ~free next to the matmul).
    # TODO(synk): at production tiles, compute stats from Cout sub-blocks (or by
    # re-reading y_ref) to bound vreg pressure.
    mu = jnp.sum(acc, axis=1, keepdims=True) * (1.0 / (NB * HW))  # (Cout, 1)
    d = acc - mu
    m2 = jnp.sum(d * d, axis=1, keepdims=True)                    # (Cout, 1)
    stats_ref[0] = jnp.concatenate([mu, m2], axis=1)              # (Cout, 2)


# -----------------------------------------------------------------------------
# Kernel 2: fused BatchNorm affine (precomputed scale/shift) + LeakyReLU(0.01)
# -----------------------------------------------------------------------------
def _bn_lrelu_kernel(y_ref, scale_ref, shift_ref, o_ref, *, negative_slope):
    # y_ref: (NB, Cout, H*W); scale/shift: (Cout, 1) precomputed in the wrapper.
    z = y_ref[...] * scale_ref[...] + shift_ref[...]
    o_ref[...] = jnp.where(z >= 0, z, negative_slope * z).astype(o_ref.dtype)


def _choose_batch_block(N, per_image_bytes, fixed_bytes, budget_bytes):
    """Largest divisor of N whose per-step VMEM working set fits the budget,
    preferring to keep >= 2 grid steps so both v7x TensorCores get work."""
    divisors = [d for d in range(1, N + 1) if N % d == 0]
    fitting = [d for d in divisors
               if fixed_bytes + d * per_image_bytes <= budget_bytes] or [1]
    nb = max(fitting)
    if N // nb < 2:
        with_two = [d for d in fitting if N // d >= 2]
        if with_two:
            nb = max(with_two)
    return nb


# -----------------------------------------------------------------------------
# Wrapper: NCHW in / NCHW out, matches nn.Conv2d(bias=False)+BatchNorm2d+LeakyReLU
# -----------------------------------------------------------------------------
def basic_conv(x_nchw, weight_oihw, gamma, beta, *,
               stride=1, padding=1, eps=1e-5, negative_slope=0.01,
               compute_dtype=jnp.float32):
    # TODO(synk): deconv=True (ConvTranspose2d/3d), is_3d=True (Conv3d/BatchNorm3d),
    # stride != 1 and non-'same' padding branches of BasicConv are not implemented.
    N, Cin, H, W = x_nchw.shape
    Cout, Cin_w, KH, KW = weight_oihw.shape
    assert Cin == Cin_w
    assert stride == 1, "this kernel implements stride=1"
    assert KH == 2 * padding + 1 and KW == 2 * padding + 1, "'same' conv only"

    HW = H * W
    Cin_pad = -(-Cin // 8) * 8                 # sublane-aligned per-tap channel block
    K_pad = KH * KW * Cin_pad
    L = HW + (KH - 1) * W + (KW - 1)           # flattened input buffer incl. halo
    cbytes = jnp.dtype(compute_dtype).itemsize

    # ---- how many images per grid step: amortize per-step overhead and enlarge
    #      lane-dense DMAs, while the working set stays within a v7x-safe budget.
    per_image = (Cin_pad * L * cbytes                  # xpad scratch
                 + K_pad * HW * cbytes                 # im2col scratch
                 + 2 * Cin * HW * 4                    # double-buffered input block
                 + 2 * Cout * HW * 4)                  # double-buffered output block
    fixed = 2 * Cout * K_pad * cbytes + 2 * Cout * 2 * 4
    budget = 24 * 1024 * 1024                          # headroom in v7x's 64 MiB/TC
    NB = _choose_batch_block(N, per_image, fixed, budget)
    G = N // NB

    vmem_need_1 = fixed + NB * per_image
    vmem_limit_1 = int(min(max(2 * vmem_need_1, 32 * 1024 * 1024),
                           64 * 1024 * 1024))

    # Free reshape: data stays in NCHW order, spatial flattened onto lanes.
    x_flat = x_nchw.reshape(N, Cin, HW).astype(jnp.float32)
    # (Cout, Cin, KH, KW) -> (Cout, KH, KW, Cin_pad) -> (Cout, K_pad): tap-major /
    # channel-minor, padded channels are zero (they meet zeroed xpad rows).
    w4 = jnp.transpose(weight_oihw.astype(jnp.float32), (0, 2, 3, 1))
    w4 = jnp.pad(w4, ((0, 0), (0, 0), (0, 0), (0, Cin_pad - Cin)))
    w2d = w4.reshape(Cout, K_pad).astype(compute_dtype)

    # --- pallas_call #1: conv + per-step stats --------------------------------
    # TODO(synk): at production Cin/HW (e.g. Cin>=128, 64x64), replace the
    # materialized im2col with per-tap accumulating (Cout,Cin)@(Cin,HW) matmuls
    # and/or tile HW (row blocks with a pad-row halo) to fit v7x's 64 MiB VMEM.
    kern1 = functools.partial(_conv_stats_kernel, H=H, W=W, KH=KH, KW=KW,
                              pad=padding, Cin=Cin, Cin_pad=Cin_pad, NB=NB)
    y, stats = pl.pallas_call(
        kern1,
        out_shape=(
            jax.ShapeDtypeStruct((N, Cout, HW), jnp.float32),
            jax.ShapeDtypeStruct((G, Cout, 2), jnp.float32),
        ),
        grid_spec=pltpu.PrefetchScalarGridSpec(
            num_scalar_prefetch=0,
            grid=(G,),
            in_specs=[
                pl.BlockSpec((NB, Cin, HW), lambda g: (g, 0, 0)),
                pl.BlockSpec((Cout, K_pad), lambda g: (0, 0)),     # weights resident
            ],
            out_specs=[
                pl.BlockSpec((NB, Cout, HW), lambda g: (g, 0, 0)),
                pl.BlockSpec((1, Cout, 2), lambda g: (g, 0, 0)),
            ],
            scratch_shapes=[
                pltpu.VMEM((NB, Cin_pad, L), compute_dtype),       # halo'd input
                pltpu.VMEM((K_pad, NB * HW), compute_dtype),       # im2col matrix
            ],
        ),
        # No cross-step accumulators -> batch axis shards across TensorCores.
        compiler_params=pltpu.CompilerParams(
            dimension_semantics=("parallel",),
            vmem_limit_bytes=vmem_limit_1),
    )(x_flat, w2d)

    # Combine per-step stats (exact ANOVA/Chan decomposition; numerically stable).
    mean_g = stats[:, :, 0]                                        # (G, Cout)
    m2_g = stats[:, :, 1]
    mean = jnp.mean(mean_g, axis=0)                                # (Cout,)
    m2 = jnp.sum(m2_g, axis=0) + (NB * HW) * jnp.sum((mean_g - mean) ** 2, axis=0)
    var = m2 / float(N * HW)                                       # biased (train-mode BN)

    # Hoisted BN coefficients: one rsqrt total, not one per grid step.
    scale = gamma.reshape(-1).astype(jnp.float32) * lax.rsqrt(var + eps)
    shift = beta.reshape(-1).astype(jnp.float32) - mean * scale
    scale = scale.reshape(Cout, 1)
    shift = shift.reshape(Cout, 1)

    # --- pallas_call #2: fused BN affine + LeakyReLU (in place over y) ---------
    kern2 = functools.partial(_bn_lrelu_kernel, negative_slope=negative_slope)
    vmem_need_2 = 4 * NB * Cout * HW * 4 + 4 * Cout * 4
    vmem_limit_2 = int(min(max(2 * vmem_need_2, 32 * 1024 * 1024),
                           64 * 1024 * 1024))
    out = pl.pallas_call(
        kern2,
        out_shape=jax.ShapeDtypeStruct((N, Cout, HW), jnp.float32),
        grid_spec=pltpu.PrefetchScalarGridSpec(
            num_scalar_prefetch=0,
            grid=(G,),
            in_specs=[
                pl.BlockSpec((NB, Cout, HW), lambda g: (g, 0, 0)),
                pl.BlockSpec((Cout, 1), lambda g: (0, 0)),
                pl.BlockSpec((Cout, 1), lambda g: (0, 0)),
            ],
            out_specs=pl.BlockSpec((NB, Cout, HW), lambda g: (g, 0, 0)),
        ),
        input_output_aliases={0: 0},               # reuse y's HBM buffer for out
        compiler_params=pltpu.CompilerParams(
            dimension_semantics=("parallel",),
            vmem_limit_bytes=vmem_limit_2),
    )(y, scale, shift)

    # Free reshape back to NCHW.
    return out.reshape(N, Cout, H, W)


# -----------------------------------------------------------------------------
# Pure-JAX reference (matches PyTorch forward in training mode)
# -----------------------------------------------------------------------------
def basic_conv_ref(x_nchw, weight_oihw, gamma, beta, *,
                   padding=1, eps=1e-5, negative_slope=0.01):
    y = lax.conv_general_dilated(
        x_nchw.astype(jnp.float32), weight_oihw.astype(jnp.float32),
        window_strides=(1, 1), padding=((padding, padding), (padding, padding)),
        dimension_numbers=("NCHW", "OIHW", "NCHW"))
    mean = jnp.mean(y, axis=(0, 2, 3), keepdims=True)
    var = jnp.mean((y - mean) ** 2, axis=(0, 2, 3), keepdims=True)  # biased
    z = (y - mean) / jnp.sqrt(var + eps)
    z = z * gamma.reshape(1, -1, 1, 1) + beta.reshape(1, -1, 1, 1)
    return jnp.where(z >= 0, z, negative_slope * z)


if __name__ == "__main__":
    key = jax.random.PRNGKey(0)
    k1, k2, k3, k4 = jax.random.split(key, 4)

    N, Cin, H, W = 2, 4, 16, 16
    Cout, KH, KW = 8, 3, 3

    x = jax.random.normal(k1, (N, Cin, H, W), dtype=jnp.float32)
    weight = jax.random.normal(k2, (Cout, Cin, KH, KW), dtype=jnp.float32) * 0.1
    # BatchNorm affine params (PyTorch default is ones/zeros; randomized
    # deterministically here to exercise the affine path)
    gamma = 1.0 + 0.1 * jax.random.normal(k3, (Cout,), dtype=jnp.float32)
    beta = 0.1 * jax.random.normal(k4, (Cout,), dtype=jnp.float32)

    fn = jax.jit(lambda xx, ww, gg, bb: basic_conv(xx, ww, gg, bb,
                                                   stride=1, padding=1))
    out = jax.block_until_ready(fn(x, weight, gamma, beta))

    ref = basic_conv_ref(x, weight, gamma, beta, padding=1)
    assert out.shape == (N, Cout, H, W)
    assert jnp.allclose(out, ref, rtol=1e-4, atol=1e-4), (
        f"max abs err {jnp.max(jnp.abs(out - ref))}")

    print("KERNEL_OK")
</pallas_src>

<mosaic_0001>
module attributes {stable_mosaic.version = 11 : i64} {
  func.func @_conv_stats_kernel(%arg0: i32, %arg1: memref<1x4x256xf32, #tpu.memory_space<vmem>>, %arg2: memref<8x72xf32, #tpu.memory_space<vmem>>, %arg3: memref<1x8x256xf32, #tpu.memory_space<vmem>>, %arg4: memref<1x8x2xf32, #tpu.memory_space<vmem>>, %arg5: memref<1x8x290xf32, #tpu.memory_space<vmem>>, %arg6: memref<72x256xf32, #tpu.memory_space<vmem>>) attributes {dimension_semantics = [#tpu.dimension_semantics<parallel>], iteration_bounds = array<i64: 2>, scalar_prefetch = 0 : i64, scratch_operands = 2 : i64, tpu.core_type = #tpu.core_type<tc>, window_params = [{transform_indices = @transform_0, window_bounds = array<i64: 1, 4, 256>}, {pipeline_mode = #tpu.pipeline_mode<synchronous>, transform_indices = @transform_1, window_bounds = array<i64: 8, 72>}, {transform_indices = @transform_2, window_bounds = array<i64: 1, 8, 256>}, {transform_indices = @transform_3, window_bounds = array<i64: 1, 8, 2>}]} {
    %cst = arith.constant 0.000000e+00 : f32
    %0 = vector.broadcast %cst : f32 to vector<1x8x17xf32>
    %c0 = arith.constant 0 : index
    %c0_0 = arith.constant 0 : index
    %c0_1 = arith.constant 0 : index
    %1 = vector.load %arg5[%c0, %c0_0, %c0_1] : memref<1x8x290xf32, #tpu.memory_space<vmem>>, vector<1x8x17xf32>
    tpu.vector_store %arg5[%c0, %c0_0, %c0_1], %0 {strides = array<i32>} : memref<1x8x290xf32, #tpu.memory_space<vmem>>, vector<1x8x17xf32>,
    %cst_2 = arith.constant 0.000000e+00 : f32
    %2 = vector.broadcast %cst_2 : f32 to vector<1x8x17xf32>
    %c0_3 = arith.constant 0 : index
    %c0_4 = arith.constant 0 : index
    %c273 = arith.constant 273 : index
    %3 = vector.load %arg5[%c0_3, %c0_4, %c273] : memref<1x8x290xf32, #tpu.memory_space<vmem>>, vector<1x8x17xf32>
    tpu.vector_store %arg5[%c0_3, %c0_4, %c273], %2 {strides = array<i32>} : memref<1x8x290xf32, #tpu.memory_space<vmem>>, vector<1x8x17xf32>,
    %cst_5 = arith.constant 0.000000e+00 : f32
    %4 = vector.broadcast %cst_5 : f32 to vector<1x4x256xf32>
    %c0_6 = arith.constant 0 : index
    %c4 = arith.constant 4 : index
    %c17 = arith.constant 17 : index
    %5 = vector.load %arg5[%c0_6, %c4, %c17] : memref<1x8x290xf32, #tpu.memory_space<vmem>>, vector<1x4x256xf32>
    tpu.vector_store %arg5[%c0_6, %c4, %c17], %4 {strides = array<i32>} : memref<1x8x290xf32, #tpu.memory_space<vmem>>, vector<1x4x256xf32>,
    %c0_7 = arith.constant 0 : index
    %c0_8 = arith.constant 0 : index
    %c0_9 = arith.constant 0 : index
    %6 = vector.load %arg1[%c0_7, %c0_8, %c0_9] : memref<1x4x256xf32, #tpu.memory_space<vmem>>, vector<1x4x256xf32>
    %c0_10 = arith.constant 0 : index
    %c0_11 = arith.constant 0 : index
    %c17_12 = arith.constant 17 : index
    %7 = vector.load %arg5[%c0_10, %c0_11, %c17_12] : memref<1x8x290xf32, #tpu.memory_space<vmem>>, vector<1x4x256xf32>
    tpu.vector_store %arg5[%c0_10, %c0_11, %c17_12], %6 {strides = array<i32>} : memref<1x8x290xf32, #tpu.memory_space<vmem>>, vector<1x4x256xf32>,
    %8 = tpu.iota {dimensions = array<i32: 1>} : vector<1x256xi32>
    %c16_i32 = arith.constant 16 : i32
    %c0_i32 = arith.constant 0 : i32
    %9 = arith.cmpi eq, %c16_i32, %c0_i32 : i32
    %c1_i32 = arith.constant 1 : i32
    %10 = arith.select %9, %c1_i32, %c16_i32 : i32
    %11 = vector.broadcast %10 : i32 to vector<1x256xi32>
    %12 = arith.remsi %8, %11 : vector<1x256xi32>
    %c0_i32_13 = arith.constant 0 : i32
    %13 = vector.broadcast %c0_i32_13 : i32 to vector<1x256xi32>
    %14 = arith.cmpi ne, %12, %13 : vector<1x256xi32>
    %c0_i32_14 = arith.constant 0 : i32
    %15 = vector.broadcast %c0_i32_14 : i32 to vector<1x256xi32>
    %16 = arith.cmpi slt, %12, %15 : vector<1x256xi32>
    %c0_i32_15 = arith.constant 0 : i32
    %17 = arith.cmpi slt, %10, %c0_i32_15 : i32
    %18 = vector.broadcast %17 : i1 to vector<1x256xi1>
    %19 = vector.broadcast %18 : vector<1x256xi1> to vector<1x256xi1>
    %20 = arith.xori %16, %19 : vector<1x256xi1>
    %21 = arith.andi %20, %14 : vector<1x256xi1>
    %22 = vector.broadcast %10 : i32 to vector<1x256xi32>
    %23 = arith.addi %12, %22 : vector<1x256xi32>
    %24 = arith.select %21, %23, %12 : vector<1x256xi1>, vector<1x256xi32>
    %c-1_i32 = arith.constant -1 : i32
    %25 = vector.broadcast %c-1_i32 : i32 to vector<1x256xi32>
    %26 = arith.addi %24, %25 : vector<1x256xi32>
    %c0_i32_16 = arith.constant 0 : i32
    %27 = vector.broadcast %c0_i32_16 : i32 to vector<1x256xi32>
    %28 = arith.cmpi sge, %26, %27 : vector<1x256xi32>
    %c-1_i32_17 = arith.constant -1 : i32
    %29 = vector.broadcast %c-1_i32_17 : i32 to vector<1x256xi32>
    %30 = arith.addi %24, %29 : vector<1x256xi32>
    %c16_i32_18 = arith.constant 16 : i32
    %31 = vector.broadcast %c16_i32_18 : i32 to vector<1x256xi32>
    %32 = arith.cmpi slt, %30, %31 : vector<1x256xi32>
    %33 = arith.andi %28, %32 : vector<1x256xi1>
    %c1_i32_19 = arith.constant 1 : i32
    %34 = vector.broadcast %c1_i32_19 : i32 to vector<1x256xi32>
    %35 = arith.addi %24, %34 : vector<1x256xi32>
    %c0_i32_20 = arith.constant 0 : i32
    %36 = vector.broadcast %c0_i32_20 : i32 to vector<1x256xi32>
    %37 = arith.cmpi sge, %35, %36 : vector<1x256xi32>
    %c1_i32_21 = arith.constant 1 : i32
    %38 = vector.broadcast %c1_i32_21 : i32 to vector<1x256xi32>
    %39 = arith.addi %24, %38 : vector<1x256xi32>
    %c16_i32_22 = arith.constant 16 : i32
    %40 = vector.broadcast %c16_i32_22 : i32 to vector<1x256xi32>
    %41 = arith.cmpi slt, %39, %40 : vector<1x256xi32>
    %42 = arith.andi %37, %41 : vector<1x256xi1>
    %c0_23 = arith.constant 0 : index
    %c0_24 = arith.constant 0 : index
    %c0_25 = arith.constant 0 : index
    %43 = vector.load %arg5[%c0_23, %c0_24, %c0_25] : memref<1x8x290xf32, #tpu.memory_space<vmem>>, vector<1x8x256xf32>
    %44 = vector.shape_cast %43 : vector<1x8x256xf32> to vector<8x256xf32>
    %cst_26 = arith.constant 0.000000e+00 : f32
    %45 = vector.shape_cast %33 : vector<1x256xi1> to vector<1x256xi1>
    %46 = vector.broadcast %45 : vector<1x256xi1> to vector<8x256xi1>
    %47 = vector.broadcast %cst_26 : f32 to vector<8x256xf32>
    %48 = arith.select %46, %44, %47 : vector<8x256xi1>, vector<8x256xf32>
    %c0_27 = arith.constant 0 : index
    %c0_28 = arith.constant 0 : index
    %49 = vector.load %arg6[%c0_27, %c0_28] : memref<72x256xf32, #tpu.memory_space<vmem>>, vector<8x256xf32>
    tpu.vector_store %arg6[%c0_27, %c0_28], %48 {strides = array<i32>} : memref<72x256xf32, #tpu.memory_space<vmem>>, vector<8x256xf32>,
    %c0_29 = arith.constant 0 : index
    %c0_30 = arith.constant 0 : index
    %c1 = arith.constant 1 : index
    %50 = vector.load %arg5[%c0_29, %c0_30, %c1] : memref<1x8x290xf32, #tpu.memory_space<vmem>>, vector<1x8x256xf32>
    %51 = vector.shape_cast %50 : vector<1x8x256xf32> to vector<8x256xf32>
    %c8 = arith.constant 8 : index
    %c0_31 = arith.constant 0 : index
    %52 = vector.load %arg6[%c8, %c0_31] : memref<72x256xf32, #tpu.memory_space<vmem>>, vector<8x256xf32>
    tpu.vector_store %arg6[%c8, %c0_31], %51 {strides = array<i32>} : memref<72x256xf32, #tpu.memory_space<vmem>>, vector<8x256xf32>,
    %c0_32 = arith.constant 0 : index
    %c0_33 = arith.constant 0 : index
    %c2 = arith.constant 2 : index
    %53 = vector.load %arg5[%c0_32, %c0_33, %c2] : memref<1x8x290xf32, #tpu.memory_space<vmem>>, vector<1x8x256xf32>
    %54 = vector.shape_cast %53 : vector<1x8x256xf32> to vector<8x256xf32>
    %cst_34 = arith.constant 0.000000e+00 : f32
    %55 = vector.shape_cast %42 : vector<1x256xi1> to vector<1x256xi1>
    %56 = vector.broadcast %55 : vector<1x256xi1> to vector<8x256xi1>
    %57 = vector.broadcast %cst_34 : f32 to vector<8x256xf32>
    %58 = arith.select %56, %54, %57 : vector<8x256xi1>, vector<8x256xf32>
    %c16 = arith.constant 16 : index
    %c0_35 = arith.constant 0 : index
    %59 = vector.load %arg6[%c16, %c0_35] : memref<72x256xf32, #tpu.memory_space<vmem>>, vector<8x256xf32>
    tpu.vector_store %arg6[%c16, %c0_35], %58 {strides = array<i32>} : memref<72x256xf32, #tpu.memory_space<vmem>>, vector<8x256xf32>,
    %c0_36 = arith.constant 0 : index
    %c0_37 = arith.constant 0 : index
    %c16_38 = arith.constant 16 : index
    %60 = vector.load %arg5[%c0_36, %c0_37, %c16_38] : memref<1x8x290xf32, #tpu.memory_space<vmem>>, vector<1x8x256xf32>
    %61 = vector.shape_cast %60 : vector<1x8x256xf32> to vector<8x256xf32>
    %cst_39 = arith.constant 0.000000e+00 : f32
    %62 = vector.shape_cast %33 : vector<1x256xi1> to vector<1x256xi1>
    %63 = vector.broadcast %62 : vector<1x256xi1> to vector<8x256xi1>
    %64 = vector.broadcast %cst_39 : f32 to vector<8x256xf32>
    %65 = arith.select %63, %61, %64 : vector<8x256xi1>, vector<8x256xf32>
    %c24 = arith.constant 24 : index
    %c0_40 = arith.constant 0 : index
    %66 = vector.load %arg6[%c24, %c0_40] : memref<72x256xf32, #tpu.memory_space<vmem>>, vector<8x256xf32>
    tpu.vector_store %arg6[%c24, %c0_40], %65 {strides = array<i32>} : memref<72x256xf32, #tpu.memory_space<vmem>>, vector<8x256xf32>,
    %c0_41 = arith.constant 0 : index
    %c0_42 = arith.constant 0 : index
    %c17_43 = arith.constant 17 : index
    %67 = vector.load %arg5[%c0_41, %c0_42, %c17_43] : memref<1x8x290xf32, #tpu.memory_space<vmem>>, vector<1x8x256xf32>
    %68 = vector.shape_cast %67 : vector<1x8x256xf32> to vector<8x256xf32>
    %c32 = arith.constant 32 : index
    %c0_44 = arith.constant 0 : index
    %69 = vector.load %arg6[%c32, %c0_44] : memref<72x256xf32, #tpu.memory_space<vmem>>, vector<8x256xf32>
    tpu.vector_store %arg6[%c32, %c0_44], %68 {strides = array<i32>} : memref<72x256xf32, #tpu.memory_space<vmem>>, vector<8x256xf32>,
    %c0_45 = arith.constant 0 : index
    %c0_46 = arith.constant 0 : index
    %c18 = arith.constant 18 : index
    %70 = vector.load %arg5[%c0_45, %c0_46, %c18] : memref<1x8x290xf32, #tpu.memory_space<vmem>>, vector<1x8x256xf32>
    %71 = vector.shape_cast %70 : vector<1x8x256xf32> to vector<8x256xf32>
    %cst_47 = arith.constant 0.000000e+00 : f32
    %72 = vector.shape_cast %42 : vector<1x256xi1> to vector<1x256xi1>
    %73 = vector.broadcast %72 : vector<1x256xi1> to vector<8x256xi1>
    %74 = vector.broadcast %cst_47 : f32 to vector<8x256xf32>
    %75 = arith.select %73, %71, %74 : vector<8x256xi1>, vector<8x256xf32>
    %c40 = arith.constant 40 : index
    %c0_48 = arith.constant 0 : index
    %76 = vector.load %arg6[%c40, %c0_48] : memref<72x256xf32, #tpu.memory_space<vmem>>, vector<8x256xf32>
    tpu.vector_store %arg6[%c40, %c0_48], %75 {strides = array<i32>} : memref<72x256xf32, #tpu.memory_space<vmem>>, vector<8x256xf32>,
    %c0_49 = arith.constant 0 : index
    %c0_50 = arith.constant 0 : index
    %c32_51 = arith.constant 32 : index
    %77 = vector.load %arg5[%c0_49, %c0_50, %c32_51] : memref<1x8x290xf32, #tpu.memory_space<vmem>>, vector<1x8x256xf32>
    %78 = vector.shape_cast %77 : vector<1x8x256xf32> to vector<8x256xf32>
    %cst_52 = arith.constant 0.000000e+00 : f32
    %79 = vector.shape_cast %33 : vector<1x256xi1> to vector<1x256xi1>
    %80 = vector.broadcast %79 : vector<1x256xi1> to vector<8x256xi1>
    %81 = vector.broadcast %cst_52 : f32 to vector<8x256xf32>
    %82 = arith.select %80, %78, %81 : vector<8x256xi1>, vector<8x256xf32>
    %c48 = arith.constant 48 : index
    %c0_53 = arith.constant 0 : index
    %83 = vector.load %arg6[%c48, %c0_53] : memref<72x256xf32, #tpu.memory_space<vmem>>, vector<8x256xf32>
    tpu.vector_store %arg6[%c48, %c0_53], %82 {strides = array<i32>} : memref<72x256xf32, #tpu.memory_space<vmem>>, vector<8x256xf32>,
    %c0_54 = arith.constant 0 : index
    %c0_55 = arith.constant 0 : index
    %c33 = arith.constant 33 : index
    %84 = vector.load %arg5[%c0_54, %c0_55, %c33] : memref<1x8x290xf32, #tpu.memory_space<vmem>>, vector<1x8x256xf32>
    %85 = vector.shape_cast %84 : vector<1x8x256xf32> to vector<8x256xf32>
    %c56 = arith.constant 56 : index
    %c0_56 = arith.constant 0 : index
    %86 = vector.load %arg6[%c56, %c0_56] : memref<72x256xf32, #tpu.memory_space<vmem>>, vector<8x256xf32>
    tpu.vector_store %arg6[%c56, %c0_56], %85 {strides = array<i32>} : memref<72x256xf32, #tpu.memory_space<vmem>>, vector<8x256xf32>,
    %c0_57 = arith.constant 0 : index
    %c0_58 = arith.constant 0 : index
    %c34 = arith.constant 34 : index
    %87 = vector.load %arg5[%c0_57, %c0_58, %c34] : memref<1x8x290xf32, #tpu.memory_space<vmem>>, vector<1x8x256xf32>
    %88 = vector.shape_cast %87 : vector<1x8x256xf32> to vector<8x256xf32>
    %cst_59 = arith.constant 0.000000e+00 : f32
    %89 = vector.shape_cast %42 : vector<1x256xi1> to vector<1x256xi1>
    %90 = vector.broadcast %89 : vector<1x256xi1> to vector<8x256xi1>
    %91 = vector.broadcast %cst_59 : f32 to vector<8x256xf32>
    %92 = arith.select %90, %88, %91 : vector<8x256xi1>, vector<8x256xf32>
    %c64 = arith.constant 64 : index
    %c0_60 = arith.constant 0 : index
    %93 = vector.load %arg6[%c64, %c0_60] : memref<72x256xf32, #tpu.memory_space<vmem>>, vector<8x256xf32>
    tpu.vector_store %arg6[%c64, %c0_60], %92 {strides = array<i32>} : memref<72x256xf32, #tpu.memory_space<vmem>>, vector<8x256xf32>,
    %c0_61 = arith.constant 0 : index
    %c0_62 = arith.constant 0 : index
    %94 = vector.load %arg2[%c0_61, %c0_62] : memref<8x72xf32, #tpu.memory_space<vmem>>, vector<8x72xf32>
    %c0_63 = arith.constant 0 : index
    %c0_64 = arith.constant 0 : index
    %95 = vector.load %arg6[%c0_63, %c0_64] : memref<72x256xf32, #tpu.memory_space<vmem>>, vector<72x256xf32>
    %cst_65 = arith.constant dense<0.000000e+00> : vector<8x256xf32>
    %96 = tpu.matmul %94, %95, %cst_65 {dimension_numbers = #tpu.dot_dimension_numbers<[1], [0], [0], [1], [0, 0, 1, 1], [], []>} : vector<8x72xf32>, vector<72x256xf32>, vector<8x256xf32> -> vector<8x256xf32>
    %c0_66 = arith.constant 0 : index
    %c0_67 = arith.constant 0 : index
    %c0_68 = arith.constant 0 : index
    %97 = vector.load %arg3[%c0_66, %c0_67, %c0_68] : memref<1x8x256xf32, #tpu.memory_space<vmem>>, vector<1x8x256xf32>
    %98 = vector.shape_cast %97 : vector<1x8x256xf32> to vector<8x256xf32>
    %99 = vector.shape_cast %96 : vector<8x256xf32> to vector<1x8x256xf32>
    tpu.vector_store %arg3[%c0_66, %c0_67, %c0_68], %99 {strides = array<i32>} : memref<1x8x256xf32, #tpu.memory_space<vmem>>, vector<1x8x256xf32>,
    %cst_69 = arith.constant dense<0.000000e+00> : vector<8xf32>
    %100 = vector.multi_reduction <add>, %96, %cst_69 [1] : vector<8x256xf32> to vector<8xf32>
    %101 = vector.shape_cast %100 : vector<8xf32> to vector<8x1xf32>
    %cst_70 = arith.constant 3.906250e-03 : f32
    %102 = vector.broadcast %cst_70 : f32 to vector<8x1xf32>
    %103 = arith.mulf %101, %102 : vector<8x1xf32>
    %104 = vector.broadcast %103 : vector<8x1xf32> to vector<8x256xf32>
    %105 = arith.subf %96, %104 : vector<8x256xf32>
    %106 = arith.mulf %105, %105 : vector<8x256xf32>
    %cst_71 = arith.constant dense<0.000000e+00> : vector<8xf32>
    %107 = vector.multi_reduction <add>, %106, %cst_71 [1] : vector<8x256xf32> to vector<8xf32>
    %108 = vector.shape_cast %107 : vector<8xf32> to vector<8x1xf32>
    %109 = tpu.concatenate %103, %108 in 1 : vector<8x1xf32>, vector<8x1xf32> -> vector<8x2xf32>
    %c0_72 = arith.constant 0 : index
    %c0_73 = arith.constant 0 : index
    %c0_74 = arith.constant 0 : index
    %110 = vector.load %arg4[%c0_72, %c0_73, %c0_74] : memref<1x8x2xf32, #tpu.memory_space<vmem>>, vector<1x8x2xf32>
    %111 = vector.shape_cast %110 : vector<1x8x2xf32> to vector<8x2xf32>
    %112 = vector.shape_cast %109 : vector<8x2xf32> to vector<1x8x2xf32>
    tpu.vector_store %arg4[%c0_72, %c0_73, %c0_74], %112 {strides = array<i32>} : memref<1x8x2xf32, #tpu.memory_space<vmem>>, vector<1x8x2xf32>,
    return
  }
  func.func @transform_0(%arg0: i32) -> (i32, i32, i32) {
    %c0_i32 = arith.constant 0 : i32
    %c0_i32_0 = arith.constant 0 : i32
    %c0_i32_1 = arith.constant 0 : i32
    return %arg0, %c0_i32, %c0_i32_0 : i32, i32, i32
  }
  func.func @transform_1(%arg0: i32) -> (i32, i32) {
    %c0_i32 = arith.constant 0 : i32
    %c0_i32_0 = arith.constant 0 : i32
    %c0_i32_1 = arith.constant 0 : i32
    return %c0_i32, %c0_i32_0 : i32, i32
  }
  func.func @transform_2(%arg0: i32) -> (i32, i32, i32) {
    %c0_i32 = arith.constant 0 : i32
    %c0_i32_0 = arith.constant 0 : i32
    %c0_i32_1 = arith.constant 0 : i32
    return %arg0, %c0_i32, %c0_i32_0 : i32, i32, i32
  }
  func.func @transform_3(%arg0: i32) -> (i32, i32, i32) {
    %c0_i32 = arith.constant 0 : i32
    %c0_i32_0 = arith.constant 0 : i32
    %c0_i32_1 = arith.constant 0 : i32
    return %arg0, %c0_i32, %c0_i32_0 : i32, i32, i32
  }
}

module attributes {stable_mosaic.version = 11 : i64} {
  func.func @_bn_lrelu_kernel(%arg0: i32, %arg1: memref<1x8x256xf32, #tpu.memory_space<vmem>>, %arg2: memref<8x1xf32, #tpu.memory_space<vmem>>, %arg3: memref<8x1xf32, #tpu.memory_space<vmem>>, %arg4: memref<1x8x256xf32, #tpu.memory_space<vmem>>) attributes {dimension_semantics = [#tpu.dimension_semantics<parallel>], iteration_bounds = array<i64: 2>, scalar_prefetch = 0 : i64, scratch_operands = 0 : i64, tpu.core_type = #tpu.core_type<tc>, window_params = [{transform_indices = @transform_0, window_bounds = array<i64: 1, 8, 256>}, {pipeline_mode = #tpu.pipeline_mode<synchronous>, transform_indices = @transform_1, window_bounds = array<i64: 8, 1>}, {pipeline_mode = #tpu.pipeline_mode<synchronous>, transform_indices = @transform_2, window_bounds = array<i64: 8, 1>}, {transform_indices = @transform_3, window_bounds = array<i64: 1, 8, 256>}]} {
    %c0 = arith.constant 0 : index
    %c0_0 = arith.constant 0 : index
    %c0_1 = arith.constant 0 : index
    %0 = vector.load %arg1[%c0, %c0_0, %c0_1] : memref<1x8x256xf32, #tpu.memory_space<vmem>>, vector<1x8x256xf32>
    %c0_2 = arith.constant 0 : index
    %c0_3 = arith.constant 0 : index
    %1 = vector.load %arg2[%c0_2, %c0_3] : memref<8x1xf32, #tpu.memory_space<vmem>>, vector<8x1xf32>
    %2 = vector.shape_cast %1 : vector<8x1xf32> to vector<1x8x1xf32>
    %3 = vector.broadcast %2 : vector<1x8x1xf32> to vector<1x8x256xf32>
    %4 = arith.mulf %0, %3 : vector<1x8x256xf32>
    %c0_4 = arith.constant 0 : index
    %c0_5 = arith.constant 0 : index
    %5 = vector.load %arg3[%c0_4, %c0_5] : memref<8x1xf32, #tpu.memory_space<vmem>>, vector<8x1xf32>
    %6 = vector.shape_cast %5 : vector<8x1xf32> to vector<1x8x1xf32>
    %7 = vector.broadcast %6 : vector<1x8x1xf32> to vector<1x8x256xf32>
    %8 = arith.addf %4, %7 : vector<1x8x256xf32>
    %cst = arith.constant 0.000000e+00 : f32
    %9 = vector.broadcast %cst : f32 to vector<1x8x256xf32>
    %10 = arith.cmpf oge, %8, %9 : vector<1x8x256xf32>
    %cst_6 = arith.constant 0.00999999977 : f32
    %11 = vector.broadcast %cst_6 : f32 to vector<1x8x256xf32>
    %12 = arith.mulf %11, %8 : vector<1x8x256xf32>
    %13 = arith.select %10, %8, %12 : vector<1x8x256xi1>, vector<1x8x256xf32>
    %c0_7 = arith.constant 0 : index
    %c0_8 = arith.constant 0 : index
    %c0_9 = arith.constant 0 : index
    %14 = vector.load %arg4[%c0_7, %c0_8, %c0_9] : memref<1x8x256xf32, #tpu.memory_space<vmem>>, vector<1x8x256xf32>
    tpu.vector_store %arg4[%c0_7, %c0_8, %c0_9], %13 {strides = array<i32>} : memref<1x8x256xf32, #tpu.memory_space<vmem>>, vector<1x8x256xf32>,
    return
  }
  func.func @transform_0(%arg0: i32) -> (i32, i32, i32) {
    %c0_i32 = arith.constant 0 : i32
    %c0_i32_0 = arith.constant 0 : i32
    %c0_i32_1 = arith.constant 0 : i32
    return %arg0, %c0_i32, %c0_i32_0 : i32, i32, i32
  }
  func.func @transform_1(%arg0: i32) -> (i32, i32) {
    %c0_i32 = arith.constant 0 : i32
    %c0_i32_0 = arith.constant 0 : i32
    %c0_i32_1 = arith.constant 0 : i32
    return %c0_i32, %c0_i32_0 : i32, i32
  }
  func.func @transform_2(%arg0: i32) -> (i32, i32) {
    %c0_i32 = arith.constant 0 : i32
    %c0_i32_0 = arith.constant 0 : i32
    %c0_i32_1 = arith.constant 0 : i32
    return %c0_i32, %c0_i32_0 : i32, i32
  }
  func.func @transform_3(%arg0: i32) -> (i32, i32, i32) {
    %c0_i32 = arith.constant 0 : i32
    %c0_i32_0 = arith.constant 0 : i32
    %c0_i32_1 = arith.constant 0 : i32
    return %arg0, %c0_i32, %c0_i32_0 : i32, i32, i32
  }
}

</mosaic_0001>

<llo_original>
// kernel: _lambda_.3
$region0: #{_lambda_.3}
  #allocation0 [shape = 'u32[]', space=smem, size = 0x4, offset = 0x4, fixed_abs, tag = 'smem constant byte address 0x4 - core index']
  #allocation1 [shape = 'u32[72,128]{1,0:T(1,128)}', space=vmem, size = 0x9000, scoped, tag = 'internal scratch']
  %s0 = inlined_call_operand.vmem [shape: f32[2,8,256], index: 0, kind: input, shape index: {}, may-alias: {0,3}]
  %s1 = inlined_call_operand.vmem [shape: f32[8,1], index: 1, kind: input, shape index: {}]
  %s2 = inlined_call_operand.vmem [shape: f32[8,1], index: 2, kind: input, shape index: {}]
  %s3 = inlined_call_operand.vmem [shape: f32[2,8,256], index: 3, kind: output, shape index: {}, may-alias: {0,3}]
  %s4 = sld [smem:[#allocation0]]
  $region45: #{_lambda_.3} parent=0
    _
  %s6 = ssub.s32 1, %s4
  %s7 = scalar_select 0, %s6, %s4
  loop: start=0, step=1, limit=4
  $region2: #{_lambda_.3} parent=0 // loop_pre_header
    _
  $region3: #{_lambda_.3} parent=0 // loop_header
    %s9 = sphi 0, %s13
    %p10 = scmp.ge.s32.totalorder %s9, 4
    %s19 = sphi 0, %s21
    %s22 = sphi 0, %s19
    %s23 = sphi 0, %s22
    %s39 = sphi 0, %s23
    %s43 = sphi 0, %s43
    %s45 = sphi 0, %s43
    %s46 = sphi 0, %s45
    %s60 = sphi 0, %s46
    %s64 = sphi 0, %s64
    %s66 = sphi 0, %s64
    %s67 = sphi 0, %s66
    %s81 = sphi 0, %s67
    %s87 = sphi 0, %s89
    %s90 = sphi 0, %s87
    %s91 = sphi 0, %s90
    %s107 = sphi 0, %s91
  $region4: #{_lambda_.3} parent=0 // loop_header_branch
    %12 = sbr.rel (%p10) target = $region8
  $region5: #{_lambda_.3} parent=0 // loop_body
    %s14 = ssub.s32 %s9, 1
    %s15 = ssub.s32 %s9, 2
    %s16 = sadd.s32 %s9, 1
    %s17 = ssub.s32 %s9, %s16
    %p18 = scmp.eq.s32.totalorder %s17, 0
    %s20 = sadd.s32 %s19, 1
    %s21 = scalar_select %p18, %s19, %s20
    %p24 = pneg %p18
    %p25 = scmp.eq.s32.totalorder %s9, 1
    %p26 = por %p24, %p25
    %p27 = scmp.ne.s32.totalorder %s19, %s22
    %p28 = scmp.eq.s32.totalorder %s9, 0
    %p29 = por %p27, %p28
    %p30 = scmp.ne.s32.totalorder %s19, %s22
    %p31 = scmp.eq.s32.totalorder %s14, 1
    %p32 = por %p30, %p31
    %p33 = scmp.ne.s32.totalorder %s22, %s23
    %p34 = scmp.eq.s32.totalorder %s14, 0
    %p35 = por %p33, %p34
    %p36 = scmp.ne.s32.totalorder %s22, %s23
    %p37 = scmp.eq.s32.totalorder %s15, 1
    %p38 = por %p36, %p37
    %p40 = scmp.ne.s32.totalorder %s23, %s39
    %p41 = scmp.eq.s32.totalorder %s15, 0
    %p42 = por %p40, %p41
    %s44 = sadd.s32 %s43, 1
    %p47 = scmp.eq.s32.totalorder %s9, 1
    %p48 = scmp.ne.s32.totalorder %s43, %s45
    %p49 = scmp.eq.s32.totalorder %s9, 0
    %p50 = por %p48, %p49
    %p51 = scmp.ne.s32.totalorder %s43, %s45
    %p52 = scmp.eq.s32.totalorder %s14, 1
    %p53 = por %p51, %p52
    %p54 = scmp.ne.s32.totalorder %s45, %s46
    %p55 = scmp.eq.s32.totalorder %s14, 0
    %p56 = por %p54, %p55
    %p57 = scmp.ne.s32.totalorder %s45, %s46
    %p58 = scmp.eq.s32.totalorder %s15, 1
    %p59 = por %p57, %p58
    %p61 = scmp.ne.s32.totalorder %s46, %s60
    %p62 = scmp.eq.s32.totalorder %s15, 0
    %p63 = por %p61, %p62
    %s65 = sadd.s32 %s64, 1
    %p68 = scmp.eq.s32.totalorder %s9, 1
    %p69 = scmp.ne.s32.totalorder %s64, %s66
    %p70 = scmp.eq.s32.totalorder %s9, 0
    %p71 = por %p69, %p70
    %p72 = scmp.ne.s32.totalorder %s64, %s66
    %p73 = scmp.eq.s32.totalorder %s14, 1
    %p74 = por %p72, %p73
    %p75 = scmp.ne.s32.totalorder %s66, %s67
    %p76 = scmp.eq.s32.totalorder %s14, 0
    %p77 = por %p75, %p76
    %p78 = scmp.ne.s32.totalorder %s66, %s67
    %p79 = scmp.eq.s32.totalorder %s15, 1
    %p80 = por %p78, %p79
    %p82 = scmp.ne.s32.totalorder %s67, %s81
    %p83 = scmp.eq.s32.totalorder %s15, 0
    %p84 = por %p82, %p83
    %s85 = ssub.s32 %s9, %s16
    %p86 = scmp.eq.s32.totalorder %s85, 0
    %s88 = sadd.s32 %s87, 1
    %s89 = scalar_select %p86, %s87, %s88
    %p92 = pneg %p86
    %p93 = scmp.eq.s32.totalorder %s9, 1
    %p94 = por %p92, %p93
    %p95 = scmp.ne.s32.totalorder %s87, %s90
    %p96 = scmp.eq.s32.totalorder %s9, 0
    %p97 = por %p95, %p96
    %p98 = scmp.ne.s32.totalorder %s87, %s90
    %p99 = scmp.eq.s32.totalorder %s14, 1
    %p100 = por %p98, %p99
    %p101 = scmp.ne.s32.totalorder %s90, %s91
    %p102 = scmp.eq.s32.totalorder %s14, 0
    %p103 = por %p101, %p102
    %p104 = scmp.ne.s32.totalorder %s90, %s91
    %p105 = scmp.eq.s32.totalorder %s15, 1
    %p106 = por %p104, %p105
    %p108 = scmp.ne.s32.totalorder %s91, %s107
    %p109 = scmp.eq.s32.totalorder %s15, 0
    %p110 = por %p108, %p109
    %p111 = scmp.le.s32.totalorder 1, %s9
    %p112 = scmp.lt.s32.totalorder %s9, 3
    %p113 = pnand %p111, %p112
    %p114 = pneg %p113
    // Predicated region
    $region9: #{_lambda_.3} parent=5 // pred_check
      _
    $region10: #{_lambda_.3} parent=5 // pred_check_branch
      %116 = sbr.rel (%p113) target = $region12
    $region11: #{_lambda_.3} parent=5 // pred_region
      %s117 = ssub.s32 %s9, 1
      // Predicated region
      $region13: #{_lambda_.3} parent=11 // pred_check
        %p118 = pneg %p56
      $region14: #{_lambda_.3} parent=11 // pred_check_branch
        %120 = sbr.rel (%p118) target = $region16
      $region15: #{_lambda_.3} parent=11 // pred_region
        _
      $region16: #{_lambda_.3} parent=11 // pred_fallthru
        _
      // Predicated region
      $region17: #{_lambda_.3} parent=11 // pred_check
        %p121 = pneg %p77
      $region18: #{_lambda_.3} parent=11 // pred_check_branch
        %123 = sbr.rel (%p121) target = $region20
      $region19: #{_lambda_.3} parent=11 // pred_region
        _
      $region20: #{_lambda_.3} parent=11 // pred_fallthru
        _
    $region12: #{_lambda_.3} parent=5 // pred_fallthru
      _
    %p124 = scmp.lt.s32.totalorder %s9, 2
    // Predicated region
    $region21: #{_lambda_.3} parent=5 // pred_check
      %p125 = pneg %p124
    $region22: #{_lambda_.3} parent=5 // pred_check_branch
      %127 = sbr.rel (%p125) target = $region24
    $region23: #{_lambda_.3} parent=5 // pred_region
      // Predicated region
      $region25: #{_lambda_.3} parent=23 // pred_check
        %p128 = pneg %p29
      $region26: #{_lambda_.3} parent=23 // pred_check_branch
        %130 = sbr.rel (%p128) target = $region28
      $region27: #{_lambda_.3} parent=23 // pred_region
        %p131 = scmp.lt.s32.totalorder %s9, 1
        %s132 = scalar_select %p131, %s9, 1
        %s133 = smul.addr %s132, 2
        %s134 = smul.addr %s133, 8
        %s135 = scalar_lea.vmem %s0, %s134
      $region28: #{_lambda_.3} parent=23 // pred_fallthru
        _
    $region24: #{_lambda_.3} parent=5 // pred_fallthru
      _
    %p136 = scmp.le.s32.totalorder 1, %s9
    %p137 = scmp.lt.s32.totalorder %s9, 3
    %p138 = pnand %p136, %p137
    %p139 = pneg %p138
    // Predicated region
    $region29: #{_lambda_.3} parent=5 // pred_check
      _
    $region30: #{_lambda_.3} parent=5 // pred_check_branch
      %141 = sbr.rel (%p138) target = $region32
    $region31: #{_lambda_.3} parent=5 // pred_region
      %s142 = ssub.s32 %s9, 1
      %p143 = scmp.lt.s32.totalorder %s14, 1
      %s144 = scalar_select %p143, %s14, 1
      %s145 = smul.addr %s144, 2
      %s146 = smul.addr %s145, 8
      %s147 = scalar_lea.vmem %s0, %s146
      %p148 = pneg %p35
      %p149 = pneg %p32
      %p150 = pneg %p56
      %p151 = pneg %p53
      %p152 = pneg %p77
      %p153 = pneg %p74
      %p154 = pneg %p103
      %p155 = pneg %p100
      %p156 = scmp.lt.s32.totalorder %s14, 1
      %s157 = scalar_select %p156, %s14, 1
      %s158 = smul.addr %s157, 2
      %s159 = smul.addr %s158, 8
      %s160 = scalar_lea.vmem %s3, %s159
      %p161 = scmp.lt.s32.totalorder %s14, 1
      %s162 = scalar_select %p161, %s14, 1
      %s163 = smul.addr %s162, 2
      %s164 = smul.addr %s163, 8
      %s165 = scalar_lea.vmem %s0, %s164
      %p166 = scmp.lt.s32.totalorder %s14, 1
      %s167 = scalar_select %p166, %s14, 1
      %s168 = smul.addr %s167, 2
      %s169 = smul.addr %s168, 8
      %s170 = scalar_lea.vmem %s3, %s169
      %v171 = vld [vmem:[%s165] sm:$0xff]
      %v172 = vld [vmem:[%s165 + $0x8] sm:$0xff]
      %v173 = vld [vmem:[%s1] sm:$0xff]
      %175 = vset.pattern.permute.xlu0 0
      %176 = vperm.xlu0 %175, %v173
      %v177 = vpop.permute.xlu0 %176
      %v179 = vmul.f32 %v171, %v177
      %v180 = vmul.f32 %v172, %v177
      %v181 = vld [vmem:[%s2] sm:$0xff]
      %183 = vset.pattern.permute.xlu0 0
      %184 = vperm.xlu0 %183, %v181
      %v185 = vpop.permute.xlu0 %184
      %v187 = vadd.f32 %v179, %v185
      %v188 = vadd.f32 %v180, %v185
      %vm189 = vcmp.ge.f32.partialorder %v187, 0.0
      %vm190 = vcmp.ge.f32.partialorder %v188, 0.0
      %v191 = vmul.f32 %v187, 0.01
      %v192 = vmul.f32 %v188, 0.01
      %v193 = vsel %vm189, %v187, %v191
      %v194 = vsel %vm190, %v188, %v192
      %195 = vst [vmem:[%s170] sm:$0xff] %v193
      %196 = vst [vmem:[%s170 + $0x8] sm:$0xff] %v194
      %p197 = scmp.lt.s32.totalorder %s14, 1
      %s198 = scalar_select %p197, %s14, 1
      %s199 = smul.addr %s198, 2
      %s200 = smul.addr %s199, 8
      %s201 = scalar_lea.vmem %s3, %s200
      // Predicated region
      $region33: #{_lambda_.3} parent=31 // pred_check
        %p202 = pneg %p100
      $region34: #{_lambda_.3} parent=31 // pred_check_branch
        %204 = sbr.rel (%p202) target = $region36
      $region35: #{_lambda_.3} parent=31 // pred_region
        _
      $region36: #{_lambda_.3} parent=31 // pred_fallthru
        _
    $region32: #{_lambda_.3} parent=5 // pred_fallthru
      _
    %p205 = scmp.le.s32.totalorder 2, %s9
    // Predicated region
    $region37: #{_lambda_.3} parent=5 // pred_check
      %p206 = pneg %p205
    $region38: #{_lambda_.3} parent=5 // pred_check_branch
      %208 = sbr.rel (%p206) target = $region40
    $region39: #{_lambda_.3} parent=5 // pred_region
      %s209 = ssub.s32 %s9, 2
      // Predicated region
      $region41: #{_lambda_.3} parent=39 // pred_check
        %p210 = pneg %p106
      $region42: #{_lambda_.3} parent=39 // pred_check_branch
        %212 = sbr.rel (%p210) target = $region44
      $region43: #{_lambda_.3} parent=39 // pred_region
        %p213 = scmp.lt.s32.totalorder %s15, 1
        %s214 = scalar_select %p213, %s15, 1
        %s215 = smul.addr %s214, 2
        %s216 = smul.addr %s215, 8
        %s217 = scalar_lea.vmem %s3, %s216
      $region44: #{_lambda_.3} parent=39 // pred_fallthru
        _
    $region40: #{_lambda_.3} parent=5 // pred_fallthru
      _
  $region6: #{_lambda_.3} parent=0 // loop_footer
    %s13 = sadd.s32 1, %s9
  $region7: #{_lambda_.3} parent=0 // loop_footer_branch
    %8 = sbr.rel target = $region3
  $region8: #{_lambda_.3} parent=0 // loop_exit
    _

// kernel: _lambda_.2
$region0: #{_lambda_.2}
  #allocation0 [shape = 'u32[]', space=smem, size = 0x4, offset = 0x4, fixed_abs, tag = 'smem constant byte address 0x4 - core index']
  #allocation1 [shape = 'u32[72,128]{1,0:T(1,128)}', space=vmem, size = 0x9000, scoped, tag = 'internal scratch']
  #allocation2 [shape = 'f32[1,8,290]{2,1,0:T(8,128)}', space=vmem, size = 0x3000, scoped, tag = 'scratch operand']
  #allocation3 [shape = 'f32[72,256]{1,0:T(8,128)}', space=vmem, size = 0x12000, scoped, tag = 'scratch operand']
  %s0 = inlined_call_operand.vmem [shape: f32[2,4,256], index: 0, kind: input, shape index: {}]
  %s1 = inlined_call_operand.vmem [shape: f32[8,72], index: 1, kind: input, shape index: {}]
  %s2 = inlined_call_operand.vmem [shape: f32[2,8,256], index: 2, kind: output, shape index: {0}]
  %s3 = inlined_call_operand.vmem [shape: f32[2,8,2], index: 3, kind: output, shape index: {1}]
  %4 = xla_tuple %s2, %s3
  %s5 = sld [smem:[#allocation0]]
  $region49: #{_lambda_.2} parent=0
    _
  %s7 = ssub.s32 1, %s5
  %s8 = scalar_select 0, %s7, %s5
  loop: start=0, step=1, limit=4
  $region2: #{_lambda_.2} parent=0 // loop_pre_header
    _
  $region3: #{_lambda_.2} parent=0 // loop_header
    %s10 = sphi 0, %s14
    %p11 = scmp.ge.s32.totalorder %s10, 4
    %s20 = sphi 0, %s22
    %s23 = sphi 0, %s20
    %s24 = sphi 0, %s23
    %s40 = sphi 0, %s24
    %s44 = sphi 0, %s44
    %s46 = sphi 0, %s44
    %s47 = sphi 0, %s46
    %s61 = sphi 0, %s47
    %s67 = sphi 0, %s69
    %s70 = sphi 0, %s67
    %s71 = sphi 0, %s70
    %s87 = sphi 0, %s71
    %s93 = sphi 0, %s95
    %s96 = sphi 0, %s93
    %s97 = sphi 0, %s96
    %s113 = sphi 0, %s97
  $region4: #{_lambda_.2} parent=0 // loop_header_branch
    %13 = sbr.rel (%p11) target = $region8
  $region5: #{_lambda_.2} parent=0 // loop_body
    %s15 = ssub.s32 %s10, 1
    %s16 = ssub.s32 %s10, 2
    %s17 = sadd.s32 %s10, 1
    %s18 = ssub.s32 %s10, %s17
    %p19 = scmp.eq.s32.totalorder %s18, 0
    %s21 = sadd.s32 %s20, 1
    %s22 = scalar_select %p19, %s20, %s21
    %p25 = pneg %p19
    %p26 = scmp.eq.s32.totalorder %s10, 1
    %p27 = por %p25, %p26
    %p28 = scmp.ne.s32.totalorder %s20, %s23
    %p29 = scmp.eq.s32.totalorder %s10, 0
    %p30 = por %p28, %p29
    %p31 = scmp.ne.s32.totalorder %s20, %s23
    %p32 = scmp.eq.s32.totalorder %s15, 1
    %p33 = por %p31, %p32
    %p34 = scmp.ne.s32.totalorder %s23, %s24
    %p35 = scmp.eq.s32.totalorder %s15, 0
    %p36 = por %p34, %p35
    %p37 = scmp.ne.s32.totalorder %s23, %s24
    %p38 = scmp.eq.s32.totalorder %s16, 1
    %p39 = por %p37, %p38
    %p41 = scmp.ne.s32.totalorder %s24, %s40
    %p42 = scmp.eq.s32.totalorder %s16, 0
    %p43 = por %p41, %p42
    %s45 = sadd.s32 %s44, 1
    %p48 = scmp.eq.s32.totalorder %s10, 1
    %p49 = scmp.ne.s32.totalorder %s44, %s46
    %p50 = scmp.eq.s32.totalorder %s10, 0
    %p51 = por %p49, %p50
    %p52 = scmp.ne.s32.totalorder %s44, %s46
    %p53 = scmp.eq.s32.totalorder %s15, 1
    %p54 = por %p52, %p53
    %p55 = scmp.ne.s32.totalorder %s46, %s47
    %p56 = scmp.eq.s32.totalorder %s15, 0
    %p57 = por %p55, %p56
    %p58 = scmp.ne.s32.totalorder %s46, %s47
    %p59 = scmp.eq.s32.totalorder %s16, 1
    %p60 = por %p58, %p59
    %p62 = scmp.ne.s32.totalorder %s47, %s61
    %p63 = scmp.eq.s32.totalorder %s16, 0
    %p64 = por %p62, %p63
    %s65 = ssub.s32 %s10, %s17
    %p66 = scmp.eq.s32.totalorder %s65, 0
    %s68 = sadd.s32 %s67, 1
    %s69 = scalar_select %p66, %s67, %s68
    %p72 = pneg %p66
    %p73 = scmp.eq.s32.totalorder %s10, 1
    %p74 = por %p72, %p73
    %p75 = scmp.ne.s32.totalorder %s67, %s70
    %p76 = scmp.eq.s32.totalorder %s10, 0
    %p77 = por %p75, %p76
    %p78 = scmp.ne.s32.totalorder %s67, %s70
    %p79 = scmp.eq.s32.totalorder %s15, 1
    %p80 = por %p78, %p79
    %p81 = scmp.ne.s32.totalorder %s70, %s71
    %p82 = scmp.eq.s32.totalorder %s15, 0
    %p83 = por %p81, %p82
    %p84 = scmp.ne.s32.totalorder %s70, %s71
    %p85 = scmp.eq.s32.totalorder %s16, 1
    %p86 = por %p84, %p85
    %p88 = scmp.ne.s32.totalorder %s71, %s87
    %p89 = scmp.eq.s32.totalorder %s16, 0
    %p90 = por %p88, %p89
    %s91 = ssub.s32 %s10, %s17
    %p92 = scmp.eq.s32.totalorder %s91, 0
    %s94 = sadd.s32 %s93, 1
    %s95 = scalar_select %p92, %s93, %s94
    %p98 = pneg %p92
    %p99 = scmp.eq.s32.totalorder %s10, 1
    %p100 = por %p98, %p99
    %p101 = scmp.ne.s32.totalorder %s93, %s96
    %p102 = scmp.eq.s32.totalorder %s10, 0
    %p103 = por %p101, %p102
    %p104 = scmp.ne.s32.totalorder %s93, %s96
    %p105 = scmp.eq.s32.totalorder %s15, 1
    %p106 = por %p104, %p105
    %p107 = scmp.ne.s32.totalorder %s96, %s97
    %p108 = scmp.eq.s32.totalorder %s15, 0
    %p109 = por %p107, %p108
    %p110 = scmp.ne.s32.totalorder %s96, %s97
    %p111 = scmp.eq.s32.totalorder %s16, 1
    %p112 = por %p110, %p111
    %p114 = scmp.ne.s32.totalorder %s97, %s113
    %p115 = scmp.eq.s32.totalorder %s16, 0
    %p116 = por %p114, %p115
    %p117 = scmp.le.s32.totalorder 1, %s10
    %p118 = scmp.lt.s32.totalorder %s10, 3
    %p119 = pnand %p117, %p118
    %p120 = pneg %p119
    // Predicated region
    $region9: #{_lambda_.2} parent=5 // pred_check
      _
    $region10: #{_lambda_.2} parent=5 // pred_check_branch
      %122 = sbr.rel (%p119) target = $region12
    $region11: #{_lambda_.2} parent=5 // pred_region
      %s123 = ssub.s32 %s10, 1
      // Predicated region
      $region13: #{_lambda_.2} parent=11 // pred_check
        %p124 = pneg %p57
      $region14: #{_lambda_.2} parent=11 // pred_check_branch
        %126 = sbr.rel (%p124) target = $region16
      $region15: #{_lambda_.2} parent=11 // pred_region
        _
      $region16: #{_lambda_.2} parent=11 // pred_fallthru
        _
    $region12: #{_lambda_.2} parent=5 // pred_fallthru
      _
    %p127 = scmp.lt.s32.totalorder %s10, 2
    // Predicated region
    $region17: #{_lambda_.2} parent=5 // pred_check
      %p128 = pneg %p127
    $region18: #{_lambda_.2} parent=5 // pred_check_branch
      %130 = sbr.rel (%p128) target = $region20
    $region19: #{_lambda_.2} parent=5 // pred_region
      // Predicated region
      $region21: #{_lambda_.2} parent=19 // pred_check
        %p131 = pneg %p30
      $region22: #{_lambda_.2} parent=19 // pred_check_branch
        %133 = sbr.rel (%p131) target = $region24
      $region23: #{_lambda_.2} parent=19 // pred_region
        %p134 = scmp.lt.s32.totalorder %s10, 1
        %s135 = scalar_select %p134, %s10, 1
        %s136 = smul.addr %s135, 2
        %s137 = smul.addr %s136, 4
        %s138 = scalar_lea.vmem %s0, %s137
      $region24: #{_lambda_.2} parent=19 // pred_fallthru
        _
    $region20: #{_lambda_.2} parent=5 // pred_fallthru
      _
    %p139 = scmp.le.s32.totalorder 1, %s10
    %p140 = scmp.lt.s32.totalorder %s10, 3
    %p141 = pnand %p139, %p140
    %p142 = pneg %p141
    // Predicated region
    $region25: #{_lambda_.2} parent=5 // pred_check
      _
    $region26: #{_lambda_.2} parent=5 // pred_check_branch
      %144 = sbr.rel (%p141) target = $region28
    $region27: #{_lambda_.2} parent=5 // pred_region
      %s145 = ssub.s32 %s10, 1
      %p146 = scmp.lt.s32.totalorder %s15, 1
      %s147 = scalar_select %p146, %s15, 1
      %s148 = smul.addr %s147, 2
      %s149 = smul.addr %s148, 4
      %s150 = scalar_lea.vmem %s0, %s149
      %p151 = pneg %p36
      %p152 = pneg %p33
      %p153 = pneg %p57
      %p154 = pneg %p54
      %p155 = pneg %p83
      %p156 = pneg %p80
      %p157 = scmp.lt.s32.totalorder %s15, 1
      %s158 = scalar_select %p157, %s15, 1
      %s159 = smul.addr %s158, 2
      %s160 = smul.addr %s159, 8
      %s161 = scalar_lea.vmem %s2, %s160
      %p162 = pneg %p109
      %p163 = pneg %p106
      %p164 = scmp.lt.s32.totalorder %s15, 1
      %s165 = scalar_select %p164, %s15, 1
      %s166 = smul.addr %s165, 8
      %s167 = scalar_lea.vmem %s3, %s166
      %p168 = scmp.lt.s32.totalorder %s15, 1
      %s169 = scalar_select %p168, %s15, 1
      %s170 = smul.addr %s169, 2
      %s171 = smul.addr %s170, 4
      %s172 = scalar_lea.vmem %s0, %s171
      %p173 = scmp.lt.s32.totalorder %s15, 1
      %s174 = scalar_select %p173, %s15, 1
      %s175 = smul.addr %s174, 2
      %s176 = smul.addr %s175, 8
      %s177 = scalar_lea.vmem %s2, %s176
      %p178 = scmp.lt.s32.totalorder %s15, 1
      %s179 = scalar_select %p178, %s15, 1
      %s180 = smul.addr %s179, 8
      %s181 = scalar_lea.vmem %s3, %s180
      %vm182 = vcmask 138240
      %183 = vst.msk [vmem:[#allocation2] sm:$0xff] %vm182, 0.0
      %vm184 = vcmask 277640
      %185 = vst.msk [vmem:[#allocation2 + $0x10] sm:$0xff] %vm184, 0.0
      %vm186 = vcmask 1047692
      %187 = vst.msk [vmem:[#allocation2] sm:$0xf0] %vm186, 0.0
      %188 = vst [vmem:[#allocation2 + $0x8] sm:$0xf0] 0.0
      %vm189 = vcmask 138244
      %190 = vst.msk [vmem:[#allocation2 + $0x10] sm:$0xf0] %vm189, 0.0
      %v191 = vld [vmem:[%s172] sm:$0xff]
      %193 = vst [vmem:[#allocation1] ss:$2 sm:$0xff] %v191
      %v194 = vld.sshfl [vmem:[#allocation1] sm:$0xff pattern:$0x75316420]
      %v195 = vld.sshfl [vmem:[#allocation1 + $0x8] sm:$0xff pattern:$0x75316420]
      %196 = vrot.lane.b32.xlu0 %v194, 17
      %v197 = vpop.permute.xlu0 %196
      %198 = vrot.lane.b32.xlu0 %v195, 17
      %v199 = vpop.permute.xlu0 %198
      %v200 = vsel %vm182, %v197, %v199
      %vm204 = vcmask 1043592
      %205 = vst.msk [vmem:[#allocation2] sm:$0xf] %vm204, %v197
      %206 = vst [vmem:[#allocation2 + $0x8] sm:$0xf] %v200
      %vm207 = vcmask 134144
      %208 = vst.msk [vmem:[#allocation2 + $0x10] sm:$0xf] %vm207, %v199
      %v209 = vlaneseq
      %v210 = vand.u32 %v209, 127
      %v211 = vadd.s32 %v210, 128
      %vm212 = vcmp.lt.s32.totalorder %v210, 0
      %v213 = vsub.s32 0, %v210
      %v214 = vsel %vm212, %v213, %v210
      %v215 = vshrl.u32 %v214, 4
      %v216 = vand.u32 %v214, 15
      %v217 = vsub.s32 0, %v216
      %v218 = vsel %vm212, %v217, %v216
      %vm219 = vcmp.lt.s32.totalorder %v211, 0
      %v220 = vsub.s32 0, %v211
      %v221 = vsel %vm219, %v220, %v211
      %v222 = vshrl.u32 %v221, 4
      %v223 = vand.u32 %v221, 15
      %v224 = vsub.s32 0, %v223
      %v225 = vsel %vm219, %v224, %v223
      %vm226 = vcmp.ne.s32.totalorder %v218, 0
      %vm227 = vcmp.ne.s32.totalorder %v225, 0
      %vm228 = vcmp.lt.s32.totalorder %v218, 0
      %vm229 = vcmp.lt.s32.totalorder %v225, 0
      %vm230 = vmand %vm228, %vm226
      %vm231 = vmand %vm229, %vm227
      %v232 = vadd.s32 %v218, 16
      %v233 = vadd.s32 %v225, 16
      %v234 = vsel %vm230, %v232, %v218
      %v235 = vsel %vm231, %v233, %v225
      %v236 = vadd.s32 %v234, 4294967295
      %v237 = vadd.s32 %v235, 4294967295
      %vm238 = vcmp.ge.s32.totalorder %v236, 0
      %vm239 = vcmp.ge.s32.totalorder %v237, 0
      %vm240 = vcmp.lt.s32.totalorder %v236, 16
      %vm241 = vcmp.lt.s32.totalorder %v237, 16
      %vm242 = vmand %vm238, %vm240
      %vm243 = vmand %vm239, %vm241
      %v244 = vadd.s32 %v234, 1
      %v245 = vadd.s32 %v235, 1
      %vm246 = vcmp.ge.s32.totalorder %v244, 0
      %vm247 = vcmp.ge.s32.totalorder %v245, 0
      %vm248 = vcmp.lt.s32.totalorder %v244, 16
      %vm249 = vcmp.lt.s32.totalorder %v245, 16
      %vm250 = vmand %vm246, %vm248
      %vm251 = vmand %vm247, %vm249
      %v252 = vld [vmem:[#allocation2] sm:$0xff]
      %v253 = vld [vmem:[#allocation2 + $0x8] sm:$0xff]
      %v254 = vsel %vm242, 1, 0
      %v255 = vsel %vm243, 1, 0
      %vm256 = vcmp.eq.s32.totalorder %v254, 1
      %vm257 = vcmp.eq.s32.totalorder %v255, 1
      %v258 = vsel %vm256, %v252, 0.0
      %v259 = vsel %vm257, %v253, 0.0
      %260 = vst [vmem:[#allocation3] sm:$0xff] %v258
      %261 = vst [vmem:[#allocation3 + $0x8] sm:$0xff] %v259
      %v262 = vld [vmem:[#allocation2] sm:$0xff]
      %v263 = vld [vmem:[#allocation2 + $0x8] sm:$0xff]
      %v264 = vld [vmem:[#allocation2 + $0x10] sm:$0xff]
      %268 = vrot.lane.b32.xlu0 %v262, 127
      %v269 = vpop.permute.xlu0 %268
      %270 = vrot.lane.b32.xlu0 %v263, 127
      %v271 = vpop.permute.xlu0 %270
      %272 = vrot.lane.b32.xlu0 %v264, 127
      %v273 = vpop.permute.xlu0 %272
      %vm274 = vcmask 1039360
      %v275 = vsel %vm274, %v269, %v271
      %v276 = vsel %vm274, %v271, %v273
      %279 = vst [vmem:[#allocation3 + $0x10] sm:$0xff] %v275
      %280 = vst [vmem:[#allocation3 + $0x18] sm:$0xff] %v276
      %v281 = vld [vmem:[#allocation2] sm:$0xff]
      %v282 = vld [vmem:[#allocation2 + $0x8] sm:$0xff]
      %v283 = vld [vmem:[#allocation2 + $0x10] sm:$0xff]
      %v284 = vsel %vm250, 1, 0
      %v285 = vsel %vm251, 1, 0
      %vm286 = vcmp.eq.s32.totalorder %v284, 1
      %vm287 = vcmp.eq.s32.totalorder %v285, 1
      %291 = vrot.lane.b32.xlu0 %v281, 126
      %v292 = vpop.permute.xlu0 %291
      %293 = vrot.lane.b32.xlu0 %v282, 126
      %v294 = vpop.permute.xlu0 %293
      %295 = vrot.lane.b32.xlu0 %v283, 126
      %v296 = vpop.permute.xlu0 %295
      %vm297 = vcmask 1031168
      %v298 = vsel %vm297, %v292, %v294
      %v299 = vsel %vm297, %v294, %v296
      %v302 = vsel %vm286, %v298, 0.0
      %v303 = vsel %vm287, %v299, 0.0
      %304 = vst [vmem:[#allocation3 + $0x20] sm:$0xff] %v302
      %305 = vst [vmem:[#allocation3 + $0x28] sm:$0xff] %v303
      %v306 = vld [vmem:[#allocation2] sm:$0xff]
      %v307 = vld [vmem:[#allocation2 + $0x8] sm:$0xff]
      %v308 = vld [vmem:[#allocation2 + $0x10] sm:$0xff]
      %312 = vrot.lane.b32.xlu0 %v306, 112
      %v313 = vpop.permute.xlu0 %312
      %314 = vrot.lane.b32.xlu0 %v307, 112
      %v315 = vpop.permute.xlu0 %314
      %316 = vrot.lane.b32.xlu0 %v308, 112
      %v317 = vpop.permute.xlu0 %316
      %vm318 = vcmask 916480
      %v319 = vsel %vm318, %v313, %v315
      %v320 = vsel %vm318, %v315, %v317
      %v323 = vsel %vm256, %v319, 0.0
      %v324 = vsel %vm257, %v320, 0.0
      %325 = vst [vmem:[#allocation3 + $0x30] sm:$0xff] %v323
      %326 = vst [vmem:[#allocation3 + $0x38] sm:$0xff] %v324
      %v327 = vld [vmem:[#allocation2] sm:$0xff]
      %v328 = vld [vmem:[#allocation2 + $0x8] sm:$0xff]
      %v329 = vld [vmem:[#allocation2 + $0x10] sm:$0xff]
      %333 = vrot.lane.b32.xlu0 %v327, 111
      %v334 = vpop.permute.xlu0 %333
      %335 = vrot.lane.b32.xlu0 %v328, 111
      %v336 = vpop.permute.xlu0 %335
      %337 = vrot.lane.b32.xlu0 %v329, 111
      %v338 = vpop.permute.xlu0 %337
      %vm339 = vcmask 908288
      %v340 = vsel %vm339, %v334, %v336
      %v341 = vsel %vm339, %v336, %v338
      %344 = vst [vmem:[#allocation3 + $0x40] sm:$0xff] %v340
      %345 = vst [vmem:[#allocation3 + $0x48] sm:$0xff] %v341
      %v346 = vld [vmem:[#allocation2] sm:$0xff]
      %v347 = vld [vmem:[#allocation2 + $0x8] sm:$0xff]
      %v348 = vld [vmem:[#allocation2 + $0x10] sm:$0xff]
      %352 = vrot.lane.b32.xlu0 %v346, 110
      %v353 = vpop.permute.xlu0 %352
      %354 = vrot.lane.b32.xlu0 %v347, 110
      %v355 = vpop.permute.xlu0 %354
      %356 = vrot.lane.b32.xlu0 %v348, 110
      %v357 = vpop.permute.xlu0 %356
      %vm358 = vcmask 900096
      %v359 = vsel %vm358, %v353, %v355
      %v360 = vsel %vm358, %v355, %v357
      %v363 = vsel %vm286, %v359, 0.0
      %v364 = vsel %vm287, %v360, 0.0
      %365 = vst [vmem:[#allocation3 + $0x50] sm:$0xff] %v363
      %366 = vst [vmem:[#allocation3 + $0x58] sm:$0xff] %v364
      %v367 = vld [vmem:[#allocation2] sm:$0xff]
      %v368 = vld [vmem:[#allocation2 + $0x8] sm:$0xff]
      %v369 = vld [vmem:[#allocation2 + $0x10] sm:$0xff]
      %373 = vrot.lane.b32.xlu0 %v367, 96
      %v374 = vpop.permute.xlu0 %373
      %375 = vrot.lane.b32.xlu0 %v368, 96
      %v376 = vpop.permute.xlu0 %375
      %377 = vrot.lane.b32.xlu0 %v369, 96
      %v378 = vpop.permute.xlu0 %377
      %vm379 = vcmask 785408
      %v380 = vsel %vm379, %v374, %v376
      %v381 = vsel %vm379, %v376, %v378
      %v384 = vsel %vm256, %v380, 0.0
      %v385 = vsel %vm257, %v381, 0.0
      %386 = vst [vmem:[#allocation3 + $0x60] sm:$0xff] %v384
      %387 = vst [vmem:[#allocation3 + $0x68] sm:$0xff] %v385
      %v388 = vld [vmem:[#allocation2] sm:$0xff]
      %v389 = vld [vmem:[#allocation2 + $0x8] sm:$0xff]
      %v390 = vld [vmem:[#allocation2 + $0x10] sm:$0xff]
      %394 = vrot.lane.b32.xlu0 %v388, 95
      %v395 = vpop.permute.xlu0 %394
      %396 = vrot.lane.b32.xlu0 %v389, 95
      %v397 = vpop.permute.xlu0 %396
      %398 = vrot.lane.b32.xlu0 %v390, 95
      %v399 = vpop.permute.xlu0 %398
      %vm400 = vcmask 777216
      %v401 = vsel %vm400, %v395, %v397
      %v402 = vsel %vm400, %v397, %v399
      %405 = vst [vmem:[#allocation3 + $0x70] sm:$0xff] %v401
      %406 = vst [vmem:[#allocation3 + $0x78] sm:$0xff] %v402
      %v407 = vld [vmem:[#allocation2] sm:$0xff]
      %v408 = vld [vmem:[#allocation2 + $0x8] sm:$0xff]
      %v409 = vld [vmem:[#allocation2 + $0x10] sm:$0xff]
      %413 = vrot.lane.b32.xlu0 %v407, 94
      %v414 = vpop.permute.xlu0 %413
      %415 = vrot.lane.b32.xlu0 %v408, 94
      %v416 = vpop.permute.xlu0 %415
      %417 = vrot.lane.b32.xlu0 %v409, 94
      %v418 = vpop.permute.xlu0 %417
      %vm419 = vcmask 769024
      %v420 = vsel %vm419, %v414, %v416
      %v421 = vsel %vm419, %v416, %v418
      %v424 = vsel %vm286, %v420, 0.0
      %v425 = vsel %vm287, %v421, 0.0
      %426 = vst [vmem:[#allocation3 + $0x80] sm:$0xff] %v424
      %427 = vst [vmem:[#allocation3 + $0x88] sm:$0xff] %v425
      %v428 = vld [vmem:[%s1] sm:$0xff]
      %v429 = vld [vmem:[#allocation3] sm:$0xff]
      %v430 = vld [vmem:[#allocation3 + $0x8] sm:$0xff]
      %v431 = vld [vmem:[#allocation3 + $0x10] sm:$0xff]
      %v432 = vld [vmem:[#allocation3 + $0x18] sm:$0xff]
      %v433 = vld [vmem:[#allocation3 + $0x20] sm:$0xff]
      %v434 = vld [vmem:[#allocation3 + $0x28] sm:$0xff]
      %v435 = vld [vmem:[#allocation3 + $0x30] sm:$0xff]
      %v436 = vld [vmem:[#allocation3 + $0x38] sm:$0xff]
      %v437 = vld [vmem:[#allocation3 + $0x40] sm:$0xff]
      %v438 = vld [vmem:[#allocation3 + $0x48] sm:$0xff]
      %v439 = vld [vmem:[#allocation3 + $0x50] sm:$0xff]
      %v440 = vld [vmem:[#allocation3 + $0x58] sm:$0xff]
      %v441 = vld [vmem:[#allocation3 + $0x60] sm:$0xff]
      %v442 = vld [vmem:[#allocation3 + $0x68] sm:$0xff]
      %v443 = vld [vmem:[#allocation3 + $0x70] sm:$0xff]
      %v444 = vld [vmem:[#allocation3 + $0x78] sm:$0xff]
      %v445 = vld [vmem:[#allocation3 + $0x80] sm:$0xff]
      %v446 = vld [vmem:[#allocation3 + $0x88] sm:$0xff]
      %vm447 = vcmask 588800
      %v449 = vsel %vm447, %v428, 0
      %451 = vmatpush.msra.mxu0 0.0
      %452 = vmatpush.msra.mxu0 0.0
      %453 = vmatpush.msra.mxu0 0.0
      %454 = vmatpush.msra.mxu0 0.0
      %455 = vmatpush.msra.mxu0 0.0
      %456 = vmatpush.msra.mxu0 0.0
      %457 = vmatpush.msra.mxu0 0.0
      %458 = vmatpush.msra.mxu0 %v445
      %459 = vmatpush.msra.mxu0 %v443
      %460 = vmatpush.msra.mxu0 %v441
      %461 = vmatpush.msra.mxu0 %v439
      %462 = vmatpush.msra.mxu0 %v437
      %463 = vmatpush.msra.mxu0 %v435
      %464 = vmatpush.msra.mxu0 %v433
      %465 = vmatpush.msra.mxu0 %v431
      %466 = vmatpush.msra.mxu0 %v429
      %467 = vmatmul.f32.gmra.mxu0 %v449
      %v468 = vpop.f32.mrf.mxu0
      %v469 = vadd.f32 0.0, %v468
      %470 = vdwg.mxu0
      %471 = vmatpush.msra.mxu0 0.0
      %472 = vmatpush.msra.mxu0 0.0
      %473 = vmatpush.msra.mxu0 0.0
      %474 = vmatpush.msra.mxu0 0.0
      %475 = vmatpush.msra.mxu0 0.0
      %476 = vmatpush.msra.mxu0 0.0
      %477 = vmatpush.msra.mxu0 0.0
      %478 = vmatpush.msra.mxu0 %v446
      %479 = vmatpush.msra.mxu0 %v444
      %480 = vmatpush.msra.mxu0 %v442
      %481 = vmatpush.msra.mxu0 %v440
      %482 = vmatpush.msra.mxu0 %v438
      %483 = vmatpush.msra.mxu0 %v436
      %484 = vmatpush.msra.mxu0 %v434
      %485 = vmatpush.msra.mxu0 %v432
      %486 = vmatpush.msra.mxu0 %v430
      %487 = vmatmul.f32.gmra.mxu0 %v449
      %v488 = vpop.f32.mrf.mxu0
      %v489 = vadd.f32 0.0, %v488
      %490 = vdwg.mxu0
      %491 = vst [vmem:[%s177] sm:$0xff] %v469
      %492 = vst [vmem:[%s177 + $0x8] sm:$0xff] %v489
      %v493 = vadd.f32 %v469, %v489
      %494 = vadd.xlane.f32.xlu0 %v493
      %v495 = vpop.xlane.xlu0 %494
      %v496 = vmul.f32 %v495, 0.00390625
      %v497 = vsub.f32 %v469, %v496
      %v498 = vsub.f32 %v489, %v496
      %v499 = vmul.f32 %v497, %v497
      %v500 = vmul.f32 %v498, %v498
      %v501 = vadd.f32 %v499, %v500
      %502 = vadd.xlane.f32.xlu0 %v501
      %v503 = vpop.xlane.xlu0 %502
      %vm504 = vcmask 7168
      %v505 = vsel %vm504, %v496, %v503
      %vm506 = vcmask 15360
      %507 = vst.msk [vmem:[%s181] sm:$0xff] %vm506, %v505
      %p508 = scmp.lt.s32.totalorder %s15, 1
      %s509 = scalar_select %p508, %s15, 1
      %s510 = smul.addr %s509, 2
      %s511 = smul.addr %s510, 8
      %s512 = scalar_lea.vmem %s2, %s511
      %p513 = scmp.lt.s32.totalorder %s15, 1
      %s514 = scalar_select %p513, %s15, 1
      %s515 = smul.addr %s514, 8
      %s516 = scalar_lea.vmem %s3, %s515
      // Predicated region
      $region29: #{_lambda_.2} parent=27 // pred_check
        %p517 = pneg %p80
      $region30: #{_lambda_.2} parent=27 // pred_check_branch
        %519 = sbr.rel (%p517) target = $region32
      $region31: #{_lambda_.2} parent=27 // pred_region
        _
      $region32: #{_lambda_.2} parent=27 // pred_fallthru
        _
      // Predicated region
      $region33: #{_lambda_.2} parent=27 // pred_check
        %p520 = pneg %p106
      $region34: #{_lambda_.2} parent=27 // pred_check_branch
        %522 = sbr.rel (%p520) target = $region36
      $region35: #{_lambda_.2} parent=27 // pred_region
        _
      $region36: #{_lambda_.2} parent=27 // pred_fallthru
        _
    $region28: #{_lambda_.2} parent=5 // pred_fallthru
      _
    %p523 = scmp.le.s32.totalorder 2, %s10
    // Predicated region
    $region37: #{_lambda_.2} parent=5 // pred_check
      %p524 = pneg %p523
    $region38: #{_lambda_.2} parent=5 // pred_check_branch
      %526 = sbr.rel (%p524) target = $region40
    $region39: #{_lambda_.2} parent=5 // pred_region
      %s527 = ssub.s32 %s10, 2
      // Predicated region
      $region41: #{_lambda_.2} parent=39 // pred_check
        %p528 = pneg %p86
      $region42: #{_lambda_.2} parent=39 // pred_check_branch
        %530 = sbr.rel (%p528) target = $region44
      $region43: #{_lambda_.2} parent=39 // pred_region
        %p531 = scmp.lt.s32.totalorder %s16, 1
        %s532 = scalar_select %p531, %s16, 1
        %s533 = smul.addr %s532, 2
        %s534 = smul.addr %s533, 8
        %s535 = scalar_lea.vmem %s2, %s534
      $region44: #{_lambda_.2} parent=39 // pred_fallthru
        _
      // Predicated region
      $region45: #{_lambda_.2} parent=39 // pred_check
        %p536 = pneg %p112
      $region46: #{_lambda_.2} parent=39 // pred_check_branch
        %538 = sbr.rel (%p536) target = $region48
      $region47: #{_lambda_.2} parent=39 // pred_region
        %p539 = scmp.lt.s32.totalorder %s16, 1
        %s540 = scalar_select %p539, %s16, 1
        %s541 = smul.addr %s540, 8
        %s542 = scalar_lea.vmem %s3, %s541
      $region48: #{_lambda_.2} parent=39 // pred_fallthru
        _
    $region40: #{_lambda_.2} parent=5 // pred_fallthru
      _
  $region6: #{_lambda_.2} parent=0 // loop_footer
    %s14 = sadd.s32 1, %s10
  $region7: #{_lambda_.2} parent=0 // loop_footer_branch
    %9 = sbr.rel target = $region3
  $region8: #{_lambda_.2} parent=0 // loop_exit
    _

</llo_original>
